<compile_context>
chip_gen: v6e
topology: v6e:2x2x1
jax: 0.10.0
libtpu: 0.0.40
codegen_flags: <defaults>
</compile_context>

<pallas_src>
import functools

import jax
import jax.numpy as jnp
from jax import lax
from jax.experimental import pallas as pl
from jax.experimental.pallas import tpu as pltpu


def _round_up(a, m):
    return ((a + m - 1) // m) * m


def _ipd_v3_kernel(x_ref, out_ref, *, margin, k, batch, block_b, chunk_b, scale):
    blk = pl.program_id(0)
    base = blk * block_b
    num_chunks = block_b // chunk_b
    # Hoisted constant (JAX does not CSE broadcast/iota inside loops).
    row_iota = lax.broadcasted_iota(jnp.int32, (chunk_b, 1), 0)

    def chunk_body(ci, acc):
        row0 = pl.multiple_of(ci * chunk_b, chunk_b)
        hinge_sum = jnp.zeros((chunk_b, 1), jnp.float32)
        # K = number of views is small -> static unroll of the pair loop.
        # TODO(synk): for large K (>= ~8) switch the pair loop to lax.fori_loop
        # to bound code size / vreg live ranges.
        for a in range(k - 1):
            xa = x_ref[a, pl.ds(row0, chunk_b), :].astype(jnp.float32)
            for c in range(a + 1, k):
                xc = x_ref[c, pl.ds(row0, chunk_b), :].astype(jnp.float32)
                diff = xa - xc
                d2 = jnp.sum(diff * diff, axis=-1, keepdims=True)        # (Ct, 1)
                dist = jnp.sqrt(jnp.maximum(d2, 1e-12))
                hinge_sum = hinge_sum + jnp.maximum(margin - dist, 0.0)
        # Mask rows past the true batch: the ragged last block's tail rows hold
        # unspecified data; the select discards them (NaN/Inf cannot leak).
        valid = (base + row0 + row_iota) < batch
        return acc + jnp.where(valid, hinge_sum, 0.0)

    acc = lax.fori_loop(0, num_chunks, chunk_body,
                        jnp.zeros((chunk_b, 1), jnp.float32))
    # scale = 2/(K*(K-1)) * 1/B, folded at trace time.
    partial = jnp.sum(acc) * scale
    out_ref[...] = jnp.full(out_ref.shape, partial, jnp.float32)


def ipd_v3_loss(x, pids=None, margin=0.3, block_b=None):
    """x: (K, B, D). pids is ignored (as in the PyTorch forward). Returns f32 scalar."""
    del pids  # label = arange(K) in the reference module; pids never enters the loss
    K, B, D = x.shape
    assert K >= 2, "IPD_V3 needs at least two views (K >= 2)"
    if not jnp.issubdtype(x.dtype, jnp.floating):
        x = x.astype(jnp.float32)        # float inputs stay in their native dtype
    itemsize = jnp.dtype(x.dtype).itemsize

    if block_b is None:
        # ~4 MiB of input per grid block (Pallas double-buffers it), multiple of 8.
        bt = max(8, ((4 * 1024 * 1024) // (K * D * itemsize) // 8) * 8)
        if B > 8:
            # Keep >= 2 grid blocks so the "parallel" axis can feed both v7x TCs.
            bt = min(bt, max(8, _round_up(-(-B // 2), 8)))
        block_b = min(bt, _round_up(B, 8))
    block_b = max(8, _round_up(int(block_b), 8))
    chunk_b = min(64, block_b)           # bounds in-kernel vreg pressure
    block_b = _round_up(block_b, chunk_b)
    num_blocks = -(-B // block_b)        # no host-side padding of x

    block_bytes = K * block_b * D * itemsize
    vmem_limit = int(min(2 * block_bytes + (16 << 20), 60 << 20))

    kernel = functools.partial(
        _ipd_v3_kernel,
        margin=float(margin),
        k=K,
        batch=B,
        block_b=block_b,
        chunk_b=chunk_b,
        scale=2.0 / float(K * (K - 1)) / float(B),
    )

    partials = pl.pallas_call(
        kernel,
        out_shape=jax.ShapeDtypeStruct((num_blocks, 8, 128), jnp.float32),
        grid_spec=pltpu.PrefetchScalarGridSpec(
            num_scalar_prefetch=0,
            grid=(num_blocks,),
            in_specs=[pl.BlockSpec((K, block_b, D), lambda i: (0, i, 0))],
            out_specs=pl.BlockSpec((1, 8, 128), lambda i: (i, 0, 0)),
        ),
        compiler_params=pltpu.CompilerParams(
            dimension_semantics=("parallel",),
            vmem_limit_bytes=vmem_limit,
        ),
    )(x)

    # Each block wrote its (already scaled) partial to a lane-dense slab.
    return jnp.sum(partials[:, 0, 0])


def ipd_v3_ref(x, pids=None, margin=0.3):
    """Pure-JAX reference mirroring the PyTorch forward (per-sample loop)."""
    del pids
    K, B, D = x.shape
    x = x.astype(jnp.float32)
    eye = jnp.eye(K, dtype=bool)
    loss = 0.0
    for i in range(B):
        xi = x[:, i, :]                                           # (K, D)
        sq = jnp.sum(xi * xi, axis=1, keepdims=True)              # (K, 1)
        g = jnp.matmul(xi, xi.T, precision=lax.Precision.HIGHEST)
        dist = jnp.sqrt(jnp.maximum(sq + sq.T - 2.0 * g, 1e-12))
        hinge = jnp.maximum(margin - dist, 0.0)
        loss = loss + jnp.sum(jnp.where(eye, 0.0, hinge)) / (K * (K - 1))
    return loss / B


if __name__ == "__main__":
    key = jax.random.PRNGKey(0)
    K, B, D = 4, 12, 128  # small shapes; D lane-dense (multiple of 128)

    # Scale so pairwise view distances straddle the margin (exercises the clamp).
    x = 0.018 * jax.random.normal(key, (K, B, D), dtype=jnp.float32)
    pids = jnp.zeros((B,), dtype=jnp.int32)  # unused by the loss, matches signature

    # Heuristic picks block_b=8 -> 2 grid blocks; the second block is ragged
    # (4 valid rows) and exercises the in-kernel tail mask (no host pad).
    loss = ipd_v3_loss(x, pids, margin=0.3)
    loss = jax.block_until_ready(loss)

    ref = ipd_v3_ref(x, pids, margin=0.3)
    ref = jax.block_until_ready(ref)

    err = abs(float(loss) - float(ref))
    assert err < 1e-5 + 1e-4 * abs(float(ref)), (float(loss), float(ref), err)

    print("KERNEL_OK")
</pallas_src>

<mosaic_0001>
module attributes {stable_mosaic.version = 11 : i64} {
  func.func @_ipd_v3_kernel(%arg0: i32, %arg1: memref<4x8x128xf32, #tpu.memory_space<vmem>>, %arg2: memref<1x8x128xf32, #tpu.memory_space<vmem>>) attributes {dimension_semantics = [#tpu.dimension_semantics<parallel>], iteration_bounds = array<i64: 2>, scalar_prefetch = 0 : i64, scratch_operands = 0 : i64, tpu.core_type = #tpu.core_type<tc>, window_params = [{transform_indices = @transform_0, window_bounds = array<i64: 4, 8, 128>}, {transform_indices = @transform_1, window_bounds = array<i64: 1, 8, 128>}]} {
    %c8_i32 = arith.constant 8 : i32
    %0 = arith.muli %arg0, %c8_i32 : i32
    %1 = tpu.iota {dimensions = array<i32: 0>} : vector<8x1xi32>
    %cst = arith.constant 0.000000e+00 : f32
    %2 = vector.broadcast %cst : f32 to vector<8x1xf32>
    %c0_i32 = arith.constant 0 : i32
    %c8_i32_0 = arith.constant 8 : i32
    %3 = arith.muli %c0_i32, %c8_i32_0 : i32
    %4 = tpu.assume_multiple %3, 8 : i32
    %cst_1 = arith.constant 0.000000e+00 : f32
    %5 = vector.broadcast %cst_1 : f32 to vector<8x1xf32>
    %c0 = arith.constant 0 : index
    %6 = arith.index_cast %4 : i32 to index
    %c0_2 = arith.constant 0 : index
    %7 = vector.load %arg1[%c0, %6, %c0_2] : memref<4x8x128xf32, #tpu.memory_space<vmem>>, vector<1x8x128xf32>
    %8 = vector.shape_cast %7 : vector<1x8x128xf32> to vector<8x128xf32>
    %c1 = arith.constant 1 : index
    %9 = arith.index_cast %4 : i32 to index
    %c0_3 = arith.constant 0 : index
    %10 = vector.load %arg1[%c1, %9, %c0_3] : memref<4x8x128xf32, #tpu.memory_space<vmem>>, vector<1x8x128xf32>
    %11 = vector.shape_cast %10 : vector<1x8x128xf32> to vector<8x128xf32>
    %12 = arith.subf %8, %11 : vector<8x128xf32>
    %13 = arith.mulf %12, %12 : vector<8x128xf32>
    %cst_4 = arith.constant dense<0.000000e+00> : vector<8xf32>
    %14 = vector.multi_reduction <add>, %13, %cst_4 [1] : vector<8x128xf32> to vector<8xf32>
    %15 = vector.shape_cast %14 : vector<8xf32> to vector<8x1xf32>
    %cst_5 = arith.constant 9.99999996E-13 : f32
    %16 = vector.broadcast %cst_5 : f32 to vector<8x1xf32>
    %17 = arith.maximumf %15, %16 : vector<8x1xf32>
    %18 = math.sqrt %17 : vector<8x1xf32>
    %cst_6 = arith.constant 3.000000e-01 : f32
    %19 = vector.broadcast %cst_6 : f32 to vector<8x1xf32>
    %20 = arith.subf %19, %18 : vector<8x1xf32>
    %cst_7 = arith.constant 0.000000e+00 : f32
    %21 = vector.broadcast %cst_7 : f32 to vector<8x1xf32>
    %22 = arith.maximumf %20, %21 : vector<8x1xf32>
    %23 = arith.addf %5, %22 : vector<8x1xf32>
    %c2 = arith.constant 2 : index
    %24 = arith.index_cast %4 : i32 to index
    %c0_8 = arith.constant 0 : index
    %25 = vector.load %arg1[%c2, %24, %c0_8] : memref<4x8x128xf32, #tpu.memory_space<vmem>>, vector<1x8x128xf32>
    %26 = vector.shape_cast %25 : vector<1x8x128xf32> to vector<8x128xf32>
    %27 = arith.subf %8, %26 : vector<8x128xf32>
    %28 = arith.mulf %27, %27 : vector<8x128xf32>
    %cst_9 = arith.constant dense<0.000000e+00> : vector<8xf32>
    %29 = vector.multi_reduction <add>, %28, %cst_9 [1] : vector<8x128xf32> to vector<8xf32>
    %30 = vector.shape_cast %29 : vector<8xf32> to vector<8x1xf32>
    %cst_10 = arith.constant 9.99999996E-13 : f32
    %31 = vector.broadcast %cst_10 : f32 to vector<8x1xf32>
    %32 = arith.maximumf %30, %31 : vector<8x1xf32>
    %33 = math.sqrt %32 : vector<8x1xf32>
    %cst_11 = arith.constant 3.000000e-01 : f32
    %34 = vector.broadcast %cst_11 : f32 to vector<8x1xf32>
    %35 = arith.subf %34, %33 : vector<8x1xf32>
    %cst_12 = arith.constant 0.000000e+00 : f32
    %36 = vector.broadcast %cst_12 : f32 to vector<8x1xf32>
    %37 = arith.maximumf %35, %36 : vector<8x1xf32>
    %38 = arith.addf %23, %37 : vector<8x1xf32>
    %c3 = arith.constant 3 : index
    %39 = arith.index_cast %4 : i32 to index
    %c0_13 = arith.constant 0 : index
    %40 = vector.load %arg1[%c3, %39, %c0_13] : memref<4x8x128xf32, #tpu.memory_space<vmem>>, vector<1x8x128xf32>
    %41 = vector.shape_cast %40 : vector<1x8x128xf32> to vector<8x128xf32>
    %42 = arith.subf %8, %41 : vector<8x128xf32>
    %43 = arith.mulf %42, %42 : vector<8x128xf32>
    %cst_14 = arith.constant dense<0.000000e+00> : vector<8xf32>
    %44 = vector.multi_reduction <add>, %43, %cst_14 [1] : vector<8x128xf32> to vector<8xf32>
    %45 = vector.shape_cast %44 : vector<8xf32> to vector<8x1xf32>
    %cst_15 = arith.constant 9.99999996E-13 : f32
    %46 = vector.broadcast %cst_15 : f32 to vector<8x1xf32>
    %47 = arith.maximumf %45, %46 : vector<8x1xf32>
    %48 = math.sqrt %47 : vector<8x1xf32>
    %cst_16 = arith.constant 3.000000e-01 : f32
    %49 = vector.broadcast %cst_16 : f32 to vector<8x1xf32>
    %50 = arith.subf %49, %48 : vector<8x1xf32>
    %cst_17 = arith.constant 0.000000e+00 : f32
    %51 = vector.broadcast %cst_17 : f32 to vector<8x1xf32>
    %52 = arith.maximumf %50, %51 : vector<8x1xf32>
    %53 = arith.addf %38, %52 : vector<8x1xf32>
    %c1_18 = arith.constant 1 : index
    %54 = arith.index_cast %4 : i32 to index
    %c0_19 = arith.constant 0 : index
    %55 = vector.load %arg1[%c1_18, %54, %c0_19] : memref<4x8x128xf32, #tpu.memory_space<vmem>>, vector<1x8x128xf32>
    %56 = vector.shape_cast %55 : vector<1x8x128xf32> to vector<8x128xf32>
    %c2_20 = arith.constant 2 : index
    %57 = arith.index_cast %4 : i32 to index
    %c0_21 = arith.constant 0 : index
    %58 = vector.load %arg1[%c2_20, %57, %c0_21] : memref<4x8x128xf32, #tpu.memory_space<vmem>>, vector<1x8x128xf32>
    %59 = vector.shape_cast %58 : vector<1x8x128xf32> to vector<8x128xf32>
    %60 = arith.subf %56, %59 : vector<8x128xf32>
    %61 = arith.mulf %60, %60 : vector<8x128xf32>
    %cst_22 = arith.constant dense<0.000000e+00> : vector<8xf32>
    %62 = vector.multi_reduction <add>, %61, %cst_22 [1] : vector<8x128xf32> to vector<8xf32>
    %63 = vector.shape_cast %62 : vector<8xf32> to vector<8x1xf32>
    %cst_23 = arith.constant 9.99999996E-13 : f32
    %64 = vector.broadcast %cst_23 : f32 to vector<8x1xf32>
    %65 = arith.maximumf %63, %64 : vector<8x1xf32>
    %66 = math.sqrt %65 : vector<8x1xf32>
    %cst_24 = arith.constant 3.000000e-01 : f32
    %67 = vector.broadcast %cst_24 : f32 to vector<8x1xf32>
    %68 = arith.subf %67, %66 : vector<8x1xf32>
    %cst_25 = arith.constant 0.000000e+00 : f32
    %69 = vector.broadcast %cst_25 : f32 to vector<8x1xf32>
    %70 = arith.maximumf %68, %69 : vector<8x1xf32>
    %71 = arith.addf %53, %70 : vector<8x1xf32>
    %c3_26 = arith.constant 3 : index
    %72 = arith.index_cast %4 : i32 to index
    %c0_27 = arith.constant 0 : index
    %73 = vector.load %arg1[%c3_26, %72, %c0_27] : memref<4x8x128xf32, #tpu.memory_space<vmem>>, vector<1x8x128xf32>
    %74 = vector.shape_cast %73 : vector<1x8x128xf32> to vector<8x128xf32>
    %75 = arith.subf %56, %74 : vector<8x128xf32>
    %76 = arith.mulf %75, %75 : vector<8x128xf32>
    %cst_28 = arith.constant dense<0.000000e+00> : vector<8xf32>
    %77 = vector.multi_reduction <add>, %76, %cst_28 [1] : vector<8x128xf32> to vector<8xf32>
    %78 = vector.shape_cast %77 : vector<8xf32> to vector<8x1xf32>
    %cst_29 = arith.constant 9.99999996E-13 : f32
    %79 = vector.broadcast %cst_29 : f32 to vector<8x1xf32>
    %80 = arith.maximumf %78, %79 : vector<8x1xf32>
    %81 = math.sqrt %80 : vector<8x1xf32>
    %cst_30 = arith.constant 3.000000e-01 : f32
    %82 = vector.broadcast %cst_30 : f32 to vector<8x1xf32>
    %83 = arith.subf %82, %81 : vector<8x1xf32>
    %cst_31 = arith.constant 0.000000e+00 : f32
    %84 = vector.broadcast %cst_31 : f32 to vector<8x1xf32>
    %85 = arith.maximumf %83, %84 : vector<8x1xf32>
    %86 = arith.addf %71, %85 : vector<8x1xf32>
    %c2_32 = arith.constant 2 : index
    %87 = arith.index_cast %4 : i32 to index
    %c0_33 = arith.constant 0 : index
    %88 = vector.load %arg1[%c2_32, %87, %c0_33] : memref<4x8x128xf32, #tpu.memory_space<vmem>>, vector<1x8x128xf32>
    %89 = vector.shape_cast %88 : vector<1x8x128xf32> to vector<8x128xf32>
    %c3_34 = arith.constant 3 : index
    %90 = arith.index_cast %4 : i32 to index
    %c0_35 = arith.constant 0 : index
    %91 = vector.load %arg1[%c3_34, %90, %c0_35] : memref<4x8x128xf32, #tpu.memory_space<vmem>>, vector<1x8x128xf32>
    %92 = vector.shape_cast %91 : vector<1x8x128xf32> to vector<8x128xf32>
    %93 = arith.subf %89, %92 : vector<8x128xf32>
    %94 = arith.mulf %93, %93 : vector<8x128xf32>
    %cst_36 = arith.constant dense<0.000000e+00> : vector<8xf32>
    %95 = vector.multi_reduction <add>, %94, %cst_36 [1] : vector<8x128xf32> to vector<8xf32>
    %96 = vector.shape_cast %95 : vector<8xf32> to vector<8x1xf32>
    %cst_37 = arith.constant 9.99999996E-13 : f32
    %97 = vector.broadcast %cst_37 : f32 to vector<8x1xf32>
    %98 = arith.maximumf %96, %97 : vector<8x1xf32>
    %99 = math.sqrt %98 : vector<8x1xf32>
    %cst_38 = arith.constant 3.000000e-01 : f32
    %100 = vector.broadcast %cst_38 : f32 to vector<8x1xf32>
    %101 = arith.subf %100, %99 : vector<8x1xf32>
    %cst_39 = arith.constant 0.000000e+00 : f32
    %102 = vector.broadcast %cst_39 : f32 to vector<8x1xf32>
    %103 = arith.maximumf %101, %102 : vector<8x1xf32>
    %104 = arith.addf %86, %103 : vector<8x1xf32>
    %105 = arith.addi %0, %4 : i32
    %106 = vector.broadcast %105 : i32 to vector<8x1xi32>
    %107 = arith.addi %106, %1 : vector<8x1xi32>
    %c12_i32 = arith.constant 12 : i32
    %108 = vector.broadcast %c12_i32 : i32 to vector<8x1xi32>
    %109 = arith.cmpi slt, %107, %108 : vector<8x1xi32>
    %cst_40 = arith.constant 0.000000e+00 : f32
    %110 = vector.broadcast %cst_40 : f32 to vector<8x1xf32>
    %111 = arith.select %109, %104, %110 : vector<8x1xi1>, vector<8x1xf32>
    %112 = arith.addf %2, %111 : vector<8x1xf32>
    %c1_i32 = arith.constant 1 : i32
    %113 = vector.shape_cast %112 : vector<8x1xf32> to vector<1x8x1xf32>
    %cst_41 = arith.constant dense<0.000000e+00> : vector<1xf32>
    %114 = vector.multi_reduction <add>, %113, %cst_41 [1, 2] : vector<1x8x1xf32> to vector<1xf32>
    %115 = vector.shape_cast %114 : vector<1xf32> to vector<1x1x1xf32>
    %116 = vector.extract %115[0, 0, 0] : f32 from vector<1x1x1xf32>
    %cst_42 = arith.constant 0.013888889 : f32
    %117 = arith.mulf %116, %cst_42 : f32
    %118 = vector.broadcast %117 : f32 to vector<1x8x128xf32>
    %c0_43 = arith.constant 0 : index
    %c0_44 = arith.constant 0 : index
    %c0_45 = arith.constant 0 : index
    %119 = vector.load %arg2[%c0_43, %c0_44, %c0_45] : memref<1x8x128xf32, #tpu.memory_space<vmem>>, vector<1x8x128xf32>
    tpu.vector_store %arg2[%c0_43, %c0_44, %c0_45], %118 {strides = array<i32>} : memref<1x8x128xf32, #tpu.memory_space<vmem>>, vector<1x8x128xf32>,
    return
  }
  func.func @transform_0(%arg0: i32) -> (i32, i32, i32) {
    %c0_i32 = arith.constant 0 : i32
    %c0_i32_0 = arith.constant 0 : i32
    %c0_i32_1 = arith.constant 0 : i32
    return %c0_i32, %arg0, %c0_i32_0 : i32, i32, i32
  }
  func.func @transform_1(%arg0: i32) -> (i32, i32, i32) {
    %c0_i32 = arith.constant 0 : i32
    %c0_i32_0 = arith.constant 0 : i32
    %c0_i32_1 = arith.constant 0 : i32
    return %arg0, %c0_i32, %c0_i32_0 : i32, i32, i32
  }
}

</mosaic_0001>

<llo_original>
// kernel: tpu_custom_call.1
$region0: #{tpu_custom_call.1}
  #allocation0 [shape = 'u32[]', space=smem, size = 0x4, offset = 0x4, fixed_abs, tag = 'smem constant byte address 0x4 - core index']
  #allocation1 [shape = 'u32[144,128]{1,0:T(1,128)}', space=vmem, size = 0x12000, scoped, tag = 'internal scratch']
  %s0 = inlined_call_operand.vmem [shape: f32[4,12,128], index: 0, kind: input, shape index: {}]
  %s1 = inlined_call_operand.hbm [shape: f32[2,8,128], index: 1, kind: output, shape index: {}]
  %s2 = sld [smem:[#allocation0]]
  $region75: #{tpu_custom_call.1} parent=0
    _
  %s4 = ssub.s32 1, %s2
  %s5 = scalar_select 0, %s4, %s2
  $region1: #{tpu_custom_call.1} parent=0
    #allocation2 [shape = 'u8[32768]{0}', space=vmem, size = 0x8000, scoped, tag = 'input window, operand 0']
    #allocation3 [shape = 'u8[8192]{0}', space=vmem, size = 0x2000, scoped, tag = 'output window, operand 0']
    #allocation4 [shape = 's32[2]{0}', space=sflag, size = 0x8, scoped, tag = 'scoped memory for tpu_custom_call.1']
    %6 = vsyncpa [#allocation4], 0
    %s7 = scalar_lea.sflag [#allocation4], 1
    %8 = vsyncpa %s7, 0
    loop: start=0, step=1, limit=4
    $region2: #{tpu_custom_call.1} parent=1 // loop_pre_header
      _
    $region3: #{tpu_custom_call.1} parent=1 // loop_header
      %s10 = sphi 0, %s14
      %p11 = scmp.ge.s32.totalorder %s10, 4
      %s20 = sphi 0, %s22
      %s23 = sphi 0, %s20
      %s24 = sphi 0, %s23
      %s40 = sphi 0, %s24
      %s46 = sphi 0, %s48
      %s49 = sphi 0, %s46
      %s50 = sphi 0, %s49
      %s66 = sphi 0, %s50
    $region4: #{tpu_custom_call.1} parent=1 // loop_header_branch
      %13 = sbr.rel (%p11) target = $region8
    $region5: #{tpu_custom_call.1} parent=1 // loop_body
      %s15 = ssub.s32 %s10, 1
      %s16 = ssub.s32 %s10, 2
      %s17 = sadd.s32 %s10, 1
      %s18 = ssub.s32 %s10, %s17
      %p19 = scmp.eq.s32.totalorder %s18, 0
      %s21 = sadd.s32 %s20, 1
      %s22 = scalar_select %p19, %s20, %s21
      %p25 = pneg %p19
      %p26 = scmp.eq.s32.totalorder %s10, 1
      %p27 = por %p25, %p26
      %p28 = scmp.ne.s32.totalorder %s20, %s23
      %p29 = scmp.eq.s32.totalorder %s10, 0
      %p30 = por %p28, %p29
      %p31 = scmp.ne.s32.totalorder %s20, %s23
      %p32 = scmp.eq.s32.totalorder %s15, 1
      %p33 = por %p31, %p32
      %p34 = scmp.ne.s32.totalorder %s23, %s24
      %p35 = scmp.eq.s32.totalorder %s15, 0
      %p36 = por %p34, %p35
      %p37 = scmp.ne.s32.totalorder %s23, %s24
      %p38 = scmp.eq.s32.totalorder %s16, 1
      %p39 = por %p37, %p38
      %p41 = scmp.ne.s32.totalorder %s24, %s40
      %p42 = scmp.eq.s32.totalorder %s16, 0
      %p43 = por %p41, %p42
      %s44 = ssub.s32 %s10, %s17
      %p45 = scmp.eq.s32.totalorder %s44, 0
      %s47 = sadd.s32 %s46, 1
      %s48 = scalar_select %p45, %s46, %s47
      %p51 = pneg %p45
      %p52 = scmp.eq.s32.totalorder %s10, 1
      %p53 = por %p51, %p52
      %p54 = scmp.ne.s32.totalorder %s46, %s49
      %p55 = scmp.eq.s32.totalorder %s10, 0
      %p56 = por %p54, %p55
      %p57 = scmp.ne.s32.totalorder %s46, %s49
      %p58 = scmp.eq.s32.totalorder %s15, 1
      %p59 = por %p57, %p58
      %p60 = scmp.ne.s32.totalorder %s49, %s50
      %p61 = scmp.eq.s32.totalorder %s15, 0
      %p62 = por %p60, %p61
      %p63 = scmp.ne.s32.totalorder %s49, %s50
      %p64 = scmp.eq.s32.totalorder %s16, 1
      %p65 = por %p63, %p64
      %p67 = scmp.ne.s32.totalorder %s50, %s66
      %p68 = scmp.eq.s32.totalorder %s16, 0
      %p69 = por %p67, %p68
      %p70 = scmp.le.s32.totalorder 1, %s10
      %p71 = scmp.lt.s32.totalorder %s10, 3
      %p72 = pnand %p70, %p71
      %p73 = pneg %p72
      // Predicated region
      $region9: #{tpu_custom_call.1} parent=5 // pred_check
        _
      $region10: #{tpu_custom_call.1} parent=5 // pred_check_branch
        %75 = sbr.rel (%p72) target = $region12
      $region11: #{tpu_custom_call.1} parent=5 // pred_region
        %s76 = ssub.s32 %s10, 1
      $region12: #{tpu_custom_call.1} parent=5 // pred_fallthru
        _
      %p77 = scmp.lt.s32.totalorder %s10, 2
      // Predicated region
      $region13: #{tpu_custom_call.1} parent=5 // pred_check
        %p78 = pneg %p77
      $region14: #{tpu_custom_call.1} parent=5 // pred_check_branch
        %80 = sbr.rel (%p78) target = $region16
      $region15: #{tpu_custom_call.1} parent=5 // pred_region
        // Predicated region
        $region17: #{tpu_custom_call.1} parent=15 // pred_check
          %p81 = pneg %p30
        $region18: #{tpu_custom_call.1} parent=15 // pred_check_branch
          %83 = sbr.rel (%p81) target = $region20
        $region19: #{tpu_custom_call.1} parent=15 // pred_region
          %s84 = sand.u32 %s20, 1
          %s85 = sand.u32 %s20, 1
          %s86 = smul.addr %s85, 32
          %s87 = scalar_lea.vmem [#allocation2], %s86
          %s88 = smul.addr %s10, 8
          %s89 = scalar_lea.vmem %s0, %s88
          // Predicated region
          $region21: #{tpu_custom_call.1} parent=19 // pred_check
            _
          $region22: #{tpu_custom_call.1} parent=19 // pred_check_branch
            %91 = sbr.rel (0) target = $region24
          $region23: #{tpu_custom_call.1} parent=19 // pred_region
            // Predicated region
            $region25: #{tpu_custom_call.1} parent=23 // pred_check
              _
            $region26: #{tpu_custom_call.1} parent=23 // pred_check_branch
              %93 = sbr.rel (0) target = $region28
            $region27: #{tpu_custom_call.1} parent=23 // pred_region
              // Predicated region
              $region40: #{tpu_custom_call.1} parent=27 // pred_check
                _
              $region41: #{tpu_custom_call.1} parent=27 // pred_check_branch
                %115 = sbr.rel (0) target = $region43
              $region42: #{tpu_custom_call.1} parent=27 // pred_region
                loop: start=0, step=1, limit=1
                $region44: #{tpu_custom_call.1} parent=42 // loop_pre_header
                  _
                $region45: #{tpu_custom_call.1} parent=42 // loop_header
                  %s117 = sphi 0, %s121
                  %p118 = scmp.ge.s32.totalorder %s117, 1
                  %s122 = sphi %s89, %s89
                  %s123 = sphi %s87, %s87
                $region46: #{tpu_custom_call.1} parent=42 // loop_header_branch
                  %120 = sbr.rel (%p118) target = $region50
                $region47: #{tpu_custom_call.1} parent=42 // loop_body
                  %v124 = vld [vmem:[%s122] sm:$0xff]
                  %125 = vst [vmem:[%s123] sm:$0xff] %v124
                  %v126 = vld [vmem:[%s122 + $0x10] sm:$0xff]
                  %127 = vst [vmem:[%s123 + $0x8] sm:$0xff] %v126
                  %v128 = vld [vmem:[%s122 + $0x20] sm:$0xff]
                  %129 = vst [vmem:[%s123 + $0x10] sm:$0xff] %v128
                  %v130 = vld [vmem:[%s122 + $0x30] sm:$0xff]
                  %131 = vst [vmem:[%s123 + $0x18] sm:$0xff] %v130
                $region48: #{tpu_custom_call.1} parent=42 // loop_footer
                  %s121 = sadd.s32 1, %s117
                $region49: #{tpu_custom_call.1} parent=42 // loop_footer_branch
                  %116 = sbr.rel target = $region45
                $region50: #{tpu_custom_call.1} parent=42 // loop_exit
                  _
              $region43: #{tpu_custom_call.1} parent=27 // pred_fallthru
                _
              // Predicated region
              $region51: #{tpu_custom_call.1} parent=27 // pred_check
                _
              $region52: #{tpu_custom_call.1} parent=27 // pred_check_branch
                %133 = sbr.rel target = $region54
              $region53: #{tpu_custom_call.1} parent=27 // pred_region
                _
              $region54: #{tpu_custom_call.1} parent=27 // pred_fallthru
                _
            $region28: #{tpu_custom_call.1} parent=23 // pred_fallthru
              _
            // Predicated region
            $region29: #{tpu_custom_call.1} parent=23 // pred_check
              _
            $region30: #{tpu_custom_call.1} parent=23 // pred_check_branch
              %95 = sbr.rel target = $region32
            $region31: #{tpu_custom_call.1} parent=23 // pred_region
              %s97 = ssub.s32 256, 1
              loop: start=0, step=1, limit=1
              $region33: #{tpu_custom_call.1} parent=31 // loop_pre_header
                _
              $region34: #{tpu_custom_call.1} parent=31 // loop_header
                %s99 = sphi 0, %s103
                %p100 = scmp.ge.s32.totalorder %s99, 1
                %s104 = sphi %s89, %s89
                %s105 = sphi %s87, %s87
              $region35: #{tpu_custom_call.1} parent=31 // loop_header_branch
                %102 = sbr.rel (%p100) target = $region39
              $region36: #{tpu_custom_call.1} parent=31 // loop_body
                %v106 = vld [vmem:[%s104] sm:%s97]
                %107 = vst [vmem:[%s105] sm:%s97] %v106
                %v108 = vld [vmem:[%s104 + $0x10] sm:%s97]
                %109 = vst [vmem:[%s105 + $0x8] sm:%s97] %v108
                %v110 = vld [vmem:[%s104 + $0x20] sm:%s97]
                %111 = vst [vmem:[%s105 + $0x10] sm:%s97] %v110
                %v112 = vld [vmem:[%s104 + $0x30] sm:%s97]
                %113 = vst [vmem:[%s105 + $0x18] sm:%s97] %v112
              $region37: #{tpu_custom_call.1} parent=31 // loop_footer
                %s103 = sadd.s32 1, %s99
              $region38: #{tpu_custom_call.1} parent=31 // loop_footer_branch
                %98 = sbr.rel target = $region34
              $region39: #{tpu_custom_call.1} parent=31 // loop_exit
                _
            $region32: #{tpu_custom_call.1} parent=23 // pred_fallthru
              _
          $region24: #{tpu_custom_call.1} parent=19 // pred_fallthru
            _
          %134 = vnop
        $region20: #{tpu_custom_call.1} parent=15 // pred_fallthru
          _
      $region16: #{tpu_custom_call.1} parent=5 // pred_fallthru
        _
      %p135 = scmp.le.s32.totalorder 1, %s10
      %p136 = scmp.lt.s32.totalorder %s10, 3
      %p137 = pnand %p135, %p136
      %p138 = pneg %p137
      // Predicated region
      $region55: #{tpu_custom_call.1} parent=5 // pred_check
        _
      $region56: #{tpu_custom_call.1} parent=5 // pred_check_branch
        %140 = sbr.rel (%p137) target = $region58
      $region57: #{tpu_custom_call.1} parent=5 // pred_region
        %s141 = ssub.s32 %s10, 1
        %s142 = sand.u32 %s23, 1
        %s143 = sand.u32 %s23, 1
        %s144 = smul.addr %s143, 32
        %s145 = scalar_lea.vmem [#allocation2], %s144
        // Predicated region
        $region59: #{tpu_custom_call.1} parent=57 // pred_check
          %p146 = pneg %p36
        $region60: #{tpu_custom_call.1} parent=57 // pred_check_branch
          %148 = sbr.rel (%p146) target = $region62
        $region61: #{tpu_custom_call.1} parent=57 // pred_region
          _
        $region62: #{tpu_custom_call.1} parent=57 // pred_fallthru
          _
        %s149 = sand.u32 %s23, 1
        %s150 = sand.u32 %s23, 1
        %s151 = smul.addr %s150, 32
        %s152 = scalar_lea.vmem [#allocation2], %s151
        %p153 = pneg %p36
        %p154 = pneg %p33
        %p155 = pneg %p62
        %p156 = pneg %p59
        %s157 = sand.u32 %s49, 1
        %s158 = scalar_lea.sflag [#allocation4], %s157
        %s159 = sand.u32 %s49, 1
        %s160 = smul.addr %s159, 8
        %s161 = scalar_lea.vmem [#allocation3], %s160
        %s162 = smul.u32 %s15, 8
        %v163 = vlaneseq
        %v164 = vshrl.u32 %v163, 7
        %v165 = vld [vmem:[%s145] sm:$0xff]
        %s166 = sadd.s32 0, 8
        %s167 = scalar_lea.vmem %s145, %s166 [#allocation2]
        %v168 = vld [vmem:[%s167] sm:$0xff]
        %v169 = vsub.f32 %v165, %v168
        %v170 = vmul.f32 %v169, %v169
        %171 = vadd.xlane.f32.xlu0 %v170
        %v172 = vpop.xlane.xlu0 %171
        %v173 = vmax.f32 %v172, 1e-12
        %v174 = vrsqrt.pop %v173
        %v175 = vmul.f32 %v173, %v174
        %vm176 = vcmp.eq.f32.partialorder %v173, inf
        %v177 = vsel %vm176, %v173, %v175
        %vm178 = vcmp.eq.f32.partialorder %v173, 0.0
        %v179 = vand.u32 %v173, 2147483648
        %v180 = vsel %vm178, %v179, %v177
        %v181 = vsub.f32 0.3, %v180
        %v182 = vmax.f32 %v181, 0.0
        %v183 = vadd.f32 %v182, 0.0
        %s184 = sadd.s32 0, 16
        %s185 = scalar_lea.vmem %s145, %s184 [#allocation2]
        %v186 = vld [vmem:[%s185] sm:$0xff]
        %v187 = vsub.f32 %v165, %v186
        %v188 = vmul.f32 %v187, %v187
        %189 = vadd.xlane.f32.xlu0 %v188
        %v190 = vpop.xlane.xlu0 %189
        %v191 = vmax.f32 %v190, 1e-12
        %v192 = vrsqrt.pop %v191
        %v193 = vmul.f32 %v191, %v192
        %vm194 = vcmp.eq.f32.partialorder %v191, inf
        %v195 = vsel %vm194, %v191, %v193
        %vm196 = vcmp.eq.f32.partialorder %v191, 0.0
        %v197 = vand.u32 %v191, 2147483648
        %v198 = vsel %vm196, %v197, %v195
        %v199 = vsub.f32 0.3, %v198
        %v200 = vmax.f32 %v199, 0.0
        %v201 = vadd.f32 %v183, %v200
        %s202 = sadd.s32 0, 24
        %s203 = scalar_lea.vmem %s145, %s202 [#allocation2]
        %v204 = vld [vmem:[%s203] sm:$0xff]
        %v205 = vsub.f32 %v165, %v204
        %v206 = vmul.f32 %v205, %v205
        %207 = vadd.xlane.f32.xlu0 %v206
        %v208 = vpop.xlane.xlu0 %207
        %v209 = vmax.f32 %v208, 1e-12
        %v210 = vrsqrt.pop %v209
        %v211 = vmul.f32 %v209, %v210
        %vm212 = vcmp.eq.f32.partialorder %v209, inf
        %v213 = vsel %vm212, %v209, %v211
        %vm214 = vcmp.eq.f32.partialorder %v209, 0.0
        %v215 = vand.u32 %v209, 2147483648
        %v216 = vsel %vm214, %v215, %v213
        %v217 = vsub.f32 0.3, %v216
        %v218 = vmax.f32 %v217, 0.0
        %v219 = vadd.f32 %v201, %v218
        %v220 = vsub.f32 %v168, %v186
        %v221 = vmul.f32 %v220, %v220
        %222 = vadd.xlane.f32.xlu0 %v221
        %v223 = vpop.xlane.xlu0 %222
        %v224 = vmax.f32 %v223, 1e-12
        %v225 = vrsqrt.pop %v224
        %v226 = vmul.f32 %v224, %v225
        %vm227 = vcmp.eq.f32.partialorder %v224, inf
        %v228 = vsel %vm227, %v224, %v226
        %vm229 = vcmp.eq.f32.partialorder %v224, 0.0
        %v230 = vand.u32 %v224, 2147483648
        %v231 = vsel %vm229, %v230, %v228
        %v232 = vsub.f32 0.3, %v231
        %v233 = vmax.f32 %v232, 0.0
        %v234 = vadd.f32 %v219, %v233
        %v235 = vsub.f32 %v168, %v204
        %v236 = vmul.f32 %v235, %v235
        %237 = vadd.xlane.f32.xlu0 %v236
        %v238 = vpop.xlane.xlu0 %237
        %v239 = vmax.f32 %v238, 1e-12
        %v240 = vrsqrt.pop %v239
        %v241 = vmul.f32 %v239, %v240
        %vm242 = vcmp.eq.f32.partialorder %v239, inf
        %v243 = vsel %vm242, %v239, %v241
        %vm244 = vcmp.eq.f32.partialorder %v239, 0.0
        %v245 = vand.u32 %v239, 2147483648
        %v246 = vsel %vm244, %v245, %v243
        %v247 = vsub.f32 0.3, %v246
        %v248 = vmax.f32 %v247, 0.0
        %v249 = vadd.f32 %v234, %v248
        %v250 = vsub.f32 %v186, %v204
        %v251 = vmul.f32 %v250, %v250
        %252 = vadd.xlane.f32.xlu0 %v251
        %v253 = vpop.xlane.xlu0 %252
        %v254 = vmax.f32 %v253, 1e-12
        %v255 = vrsqrt.pop %v254
        %v256 = vmul.f32 %v254, %v255
        %vm257 = vcmp.eq.f32.partialorder %v254, inf
        %v258 = vsel %vm257, %v254, %v256
        %vm259 = vcmp.eq.f32.partialorder %v254, 0.0
        %v260 = vand.u32 %v254, 2147483648
        %v261 = vsel %vm259, %v260, %v258
        %v262 = vsub.f32 0.3, %v261
        %v263 = vmax.f32 %v262, 0.0
        %v264 = vadd.f32 %v249, %v263
        %s265 = sadd.s32 %s162, 0
        %v266 = vstv %s265
        %v267 = vadd.s32 %v266, %v164
        %vm268 = vcmp.lt.s32.totalorder %v267, 12
        %v269 = vsel %vm268, %v264, 0.0
        %v270 = vadd.f32 %v269, 0.0
        %vm271 = vcmask 7168
        %v272 = vsel %vm271, %v270, 0.0
        %273 = vadd.xlane.f32.xlu0 %v272
        %v274 = vpop.xlane.xlu0 %273
        %v275 = vrot.slane %v274, 4
        %v276 = vadd.f32 %v274, %v275
        %v277 = vrot.slane %v276, 2
        %v278 = vadd.f32 %v276, %v277
        %v279 = vrot.slane %v278, 1
        %v280 = vadd.f32 %v278, %v279
        %s281 = vtos %v280
        %s282 = smul.f32 %s281, 0.013888889
        %v283 = vstv %s282
        %284 = vst [vmem:[%s161] sm:$0xff] %v283
        %s285 = sand.u32 %s49, 1
        %s286 = scalar_lea.sflag [#allocation4], %s285
        %s287 = sand.u32 %s49, 1
        %s288 = smul.addr %s287, 8
        %s289 = scalar_lea.vmem [#allocation3], %s288
        // Predicated region
        $region63: #{tpu_custom_call.1} parent=57 // pred_check
          %p290 = pneg %p59
        $region64: #{tpu_custom_call.1} parent=57 // pred_check_branch
          %292 = sbr.rel (%p290) target = $region66
        $region65: #{tpu_custom_call.1} parent=57 // pred_region
          %s294 = ssub.s32 128, 128
          %295 = vsyncadd %s286, %s294
          %s296 = smul.addr %s15, 128
          %s297 = scalar_lea.hbm %s1, %s296
          %s299 = sshll.u32 %s289, 4
          %s300 = int_to_ptr.vmem [resolvable:$true] %s299
          %302 = dma.vmem_to_hbm [thread:$0]  %s300, 128, %s297, %s286
        $region66: #{tpu_custom_call.1} parent=57 // pred_fallthru
          _
      $region58: #{tpu_custom_call.1} parent=5 // pred_fallthru
        _
      %p303 = scmp.le.s32.totalorder 2, %s10
      // Predicated region
      $region67: #{tpu_custom_call.1} parent=5 // pred_check
        %p304 = pneg %p303
      $region68: #{tpu_custom_call.1} parent=5 // pred_check_branch
        %306 = sbr.rel (%p304) target = $region70
      $region69: #{tpu_custom_call.1} parent=5 // pred_region
        %s307 = ssub.s32 %s10, 2
        // Predicated region
        $region71: #{tpu_custom_call.1} parent=69 // pred_check
          %p308 = pneg %p65
        $region72: #{tpu_custom_call.1} parent=69 // pred_check_branch
          %310 = sbr.rel (%p308) target = $region74
        $region73: #{tpu_custom_call.1} parent=69 // pred_region
          %s311 = sand.u32 %s50, 1
          %s312 = scalar_lea.sflag [#allocation4], %s311
          %s313 = sand.u32 %s50, 1
          %s314 = smul.addr %s313, 8
          %s315 = scalar_lea.vmem [#allocation3], %s314
          %316 = dma.done %s312, 128
        $region74: #{tpu_custom_call.1} parent=69 // pred_fallthru
          _
      $region70: #{tpu_custom_call.1} parent=5 // pred_fallthru
        _
    $region6: #{tpu_custom_call.1} parent=1 // loop_footer
      %s14 = sadd.s32 1, %s10
    $region7: #{tpu_custom_call.1} parent=1 // loop_footer_branch
      %9 = sbr.rel target = $region3
    $region8: #{tpu_custom_call.1} parent=1 // loop_exit
      _
    %317 = vsyncpa [#allocation4], 1
    %s318 = scalar_lea.sflag [#allocation4], 1
    %319 = vsyncpa %s318, 1

</llo_original>
